<compile_context>
chip_gen: v7x
topology: tpu7x:2x2x1
jax: 0.10.0
libtpu: 0.0.40
codegen_flags: <defaults>
</compile_context>

<pallas_src>
import functools

import jax
import jax.numpy as jnp
from jax import lax
from jax.experimental import pallas as pl
from jax.experimental.pallas import tpu as pltpu


def _round_up(x: int, m: int) -> int:
    return ((x + m - 1) // m) * m


def noisy_linear_kernel(x_ref, mu_w_ref, sig_w_ref, eps_w_ref, b_ref,
                        o_ref, acc_ref, *, k_tail):
    k = pl.program_id(2)

    @pl.when(k == 0)
    def _():
        acc_ref[...] = jnp.zeros_like(acc_ref)

    # Perturbed weight tile built on the VPU; hides under the MXU/DMA.
    w_tile = mu_w_ref[...] + sig_w_ref[...] * eps_w_ref[...]          # (tk, tn)

    if k_tail is not None:
        # P % tk != 0: the last K block of the (unpadded) weight refs reads
        # past the end of the arrays.  x's K tail is real zeros, but
        # 0 * garbage could still be NaN/Inf, so zero the garbage rows.
        is_last_k = k == pl.num_programs(2) - 1
        rows = lax.broadcasted_iota(jnp.int32, w_tile.shape, 0)
        limit = jnp.where(is_last_k, k_tail, w_tile.shape[0])
        w_tile = jnp.where(rows < limit, w_tile, 0.0)

    acc_ref[...] += jnp.dot(x_ref[...], w_tile,
                            preferred_element_type=jnp.float32)

    @pl.when(k == pl.num_programs(2) - 1)
    def _():
        o_ref[...] = (acc_ref[...] + b_ref[...]).astype(o_ref.dtype)


@functools.partial(jax.jit, static_argnames=("tm", "tn", "tk"))
def noisy_linear(x, mu_w, sig_w, eps_w, mu_b, sig_b, eps_b,
                 *, tm=512, tn=512, tk=512):
    B, P = x.shape
    Pw, Q = mu_w.shape
    assert P == Pw, (P, Pw)
    out_dtype = x.dtype

    # Clamp tiles to the problem while keeping TPU alignment
    # (second-minor multiple of 8, minor multiple of 128).
    tm = min(tm, _round_up(B, 8))
    tn = min(tn, _round_up(Q, 128))
    tk = min(tk, _round_up(P, 128))

    # Only the reduction (K) tail needs real zeros, and only on the x side.
    # No padded copies of the weight arrays are made.
    Pp = _round_up(P, tk)
    xp = jnp.pad(x, ((0, 0), (0, Pp - P))) if Pp != P else x

    # Fuse the three bias streams into one lane-dense (1, Q) input.
    bias = (mu_b + sig_b * eps_b).reshape(1, Q)

    n_i = pl.cdiv(B, tm)
    n_j = pl.cdiv(Q, tn)
    n_k = Pp // tk
    grid = (n_j, n_i, n_k)   # j outermost -> megacore split lands on Q (v7x)

    k_tail = (P % tk) or None
    kernel = functools.partial(noisy_linear_kernel, k_tail=k_tail)

    # Honest advisory traffic: weights re-stream once per i block, x once per
    # j block, one output write, bias once per i block.
    cost = pl.CostEstimate(
        flops=2 * B * P * Q + 2 * P * Q,
        transcendentals=0,
        bytes_accessed=4 * (n_j * B * Pp + n_i * 3 * P * Q + B * Q + n_i * Q),
    )

    # Double-buffered working set + margin; ~11 MiB at the 512 defaults, so
    # it stays inside v7x's 64 MiB physical / 32 MiB scoped VMEM with room.
    work_set = 4 * (2 * tm * tk          # x tile, double-buffered
                    + 2 * 3 * tk * tn    # mu_w/sig_w/eps_w tiles
                    + 2 * tn             # fused bias tile
                    + 2 * tm * tn        # output tile
                    + tm * tn)           # f32 accumulator
    vmem_limit = min(64 * 1024 * 1024, max(2 * work_set, 24 * 1024 * 1024))

    out = pl.pallas_call(
        kernel,
        out_shape=jax.ShapeDtypeStruct((B, Q), out_dtype),
        grid_spec=pltpu.PrefetchScalarGridSpec(
            num_scalar_prefetch=0,
            grid=grid,
            in_specs=[
                pl.BlockSpec((tm, tk), lambda j, i, k: (i, k)),   # x (K-padded)
                pl.BlockSpec((tk, tn), lambda j, i, k: (k, j)),   # mu_w
                pl.BlockSpec((tk, tn), lambda j, i, k: (k, j)),   # sig_w
                pl.BlockSpec((tk, tn), lambda j, i, k: (k, j)),   # eps_w
                pl.BlockSpec((1, tn), lambda j, i, k: (0, j)),    # fused bias
            ],
            out_specs=pl.BlockSpec((tm, tn), lambda j, i, k: (i, j)),
            scratch_shapes=[pltpu.VMEM((tm, tn), jnp.float32)],
        ),
        compiler_params=pltpu.CompilerParams(
            dimension_semantics=("parallel", "parallel", "arbitrary"),
            vmem_limit_bytes=vmem_limit,
        ),
        cost_estimate=cost,
    )(xp, mu_w, sig_w, eps_w, bias)

    return out


def _reference(x, mu_w, sig_w, eps_w, mu_b, sig_b, eps_b):
    W = mu_w + sig_w * eps_w
    b = mu_b + sig_b * eps_b
    return x @ W + b[None, :]


if __name__ == "__main__":
    key = jax.random.PRNGKey(0)

    # --- Small shapes consistent with the module: batch=8, in=32, out=64 ---
    B, P, Q = 8, 32, 64
    k_x, k_muw, k_epsw, k_epsb, k_big = jax.random.split(key, 5)

    mu_w = jax.random.uniform(k_muw, (P, Q), dtype=jnp.float32) * 0.01
    sig_w = jnp.ones((P, Q), jnp.float32) * 0.017
    mu_b = jnp.zeros((Q,), jnp.float32)
    sig_b = jnp.ones((Q,), jnp.float32) * 0.017
    eps_w = jax.random.normal(k_epsw, (P, Q), dtype=jnp.float32)
    eps_b = jax.random.normal(k_epsb, (Q,), dtype=jnp.float32)
    x = jax.random.normal(k_x, (B, P), dtype=jnp.float32)

    out = jax.block_until_ready(
        noisy_linear(x, mu_w, sig_w, eps_w, mu_b, sig_b, eps_b))
    ref = _reference(x, mu_w, sig_w, eps_w, mu_b, sig_b, eps_b)
    assert out.shape == (B, Q)
    assert jnp.allclose(out, ref, atol=1e-5, rtol=1e-5), \
        float(jnp.max(jnp.abs(out - ref)))

    # --- Larger shapes: exercises a (2, 2, 2) grid with edge tiles in every
    #     dimension and no wrapper-side padding of the weight arrays ---
    B2, P2, Q2 = 650, 700, 650
    ks = jax.random.split(k_big, 4)
    mu_w2 = jax.random.uniform(ks[0], (P2, Q2), dtype=jnp.float32) * 0.01
    sig_w2 = jnp.ones((P2, Q2), jnp.float32) * 0.017
    mu_b2 = jnp.zeros((Q2,), jnp.float32)
    sig_b2 = jnp.ones((Q2,), jnp.float32) * 0.017
    eps_w2 = jax.random.normal(ks[1], (P2, Q2), dtype=jnp.float32)
    eps_b2 = jax.random.normal(ks[2], (Q2,), dtype=jnp.float32)
    x2 = jax.random.normal(ks[3], (B2, P2), dtype=jnp.float32)

    out2 = jax.block_until_ready(
        noisy_linear(x2, mu_w2, sig_w2, eps_w2, mu_b2, sig_b2, eps_b2))
    ref2 = _reference(x2, mu_w2, sig_w2, eps_w2, mu_b2, sig_b2, eps_b2)
    assert out2.shape == (B2, Q2)
    assert jnp.allclose(out2, ref2, atol=2e-4, rtol=2e-4), \
        float(jnp.max(jnp.abs(out2 - ref2)))

    print("KERNEL_OK")
</pallas_src>

<mosaic_0001>
module attributes {stable_mosaic.version = 11 : i64} {
  func.func @noisy_linear_kernel(%arg0: i32, %arg1: i32, %arg2: i32, %arg3: memref<8x128xf32, #tpu.memory_space<vmem>>, %arg4: memref<128x128xf32, #tpu.memory_space<vmem>>, %arg5: memref<128x128xf32, #tpu.memory_space<vmem>>, %arg6: memref<128x128xf32, #tpu.memory_space<vmem>>, %arg7: memref<1x128xf32, #tpu.memory_space<vmem>>, %arg8: memref<8x128xf32, #tpu.memory_space<vmem>>, %arg9: memref<8x128xf32, #tpu.memory_space<vmem>>) attributes {dimension_semantics = [#tpu.dimension_semantics<parallel>, #tpu.dimension_semantics<parallel>, #tpu.dimension_semantics<arbitrary>], iteration_bounds = array<i64: 1, 1, 1>, scalar_prefetch = 0 : i64, scratch_operands = 1 : i64, tpu.core_type = #tpu.core_type<tc>, window_params = [{transform_indices = @transform_0, window_bounds = array<i64: 8, 128>}, {transform_indices = @transform_1, window_bounds = array<i64: 128, 128>}, {transform_indices = @transform_2, window_bounds = array<i64: 128, 128>}, {transform_indices = @transform_3, window_bounds = array<i64: 128, 128>}, {transform_indices = @transform_4, window_bounds = array<i64: 1, 128>}, {transform_indices = @transform_5, window_bounds = array<i64: 8, 128>}]} {
    %c0_i32 = arith.constant 0 : i32
    %0 = arith.cmpi eq, %arg2, %c0_i32 : i32
    %1 = arith.extui %0 : i1 to i32
    %c0_i32_0 = arith.constant 0 : i32
    %2 = arith.cmpi ne, %1, %c0_i32_0 : i32
    scf.if %2 {
      %cst_16 = arith.constant 0.000000e+00 : f32
      %23 = vector.broadcast %cst_16 : f32 to vector<8x128xf32>
      %c0_17 = arith.constant 0 : index
      %c0_18 = arith.constant 0 : index
      %24 = vector.load %arg9[%c0_17, %c0_18] : memref<8x128xf32, #tpu.memory_space<vmem>>, vector<8x128xf32>
      tpu.vector_store %arg9[%c0_17, %c0_18], %23 {strides = array<i32>} : memref<8x128xf32, #tpu.memory_space<vmem>>, vector<8x128xf32>,
    } else {
    }
    %c0 = arith.constant 0 : index
    %c0_1 = arith.constant 0 : index
    %3 = vector.load %arg4[%c0, %c0_1] : memref<128x128xf32, #tpu.memory_space<vmem>>, vector<128x128xf32>
    %c0_2 = arith.constant 0 : index
    %c0_3 = arith.constant 0 : index
    %4 = vector.load %arg5[%c0_2, %c0_3] : memref<128x128xf32, #tpu.memory_space<vmem>>, vector<128x128xf32>
    %c0_4 = arith.constant 0 : index
    %c0_5 = arith.constant 0 : index
    %5 = vector.load %arg6[%c0_4, %c0_5] : memref<128x128xf32, #tpu.memory_space<vmem>>, vector<128x128xf32>
    %6 = arith.mulf %4, %5 : vector<128x128xf32>
    %7 = arith.addf %3, %6 : vector<128x128xf32>
    %c0_i32_6 = arith.constant 0 : i32
    %8 = arith.cmpi eq, %arg2, %c0_i32_6 : i32
    %9 = tpu.iota {dimensions = array<i32: 0>} : vector<128x128xi32>
    %c32_i32 = arith.constant 32 : i32
    %c128_i32 = arith.constant 128 : i32
    %10 = arith.select %8, %c32_i32, %c128_i32 : i32
    %11 = vector.broadcast %10 : i32 to vector<128x128xi32>
    %12 = arith.cmpi slt, %9, %11 : vector<128x128xi32>
    %cst = arith.constant 0.000000e+00 : f32
    %13 = vector.broadcast %cst : f32 to vector<128x128xf32>
    %14 = arith.select %12, %7, %13 : vector<128x128xi1>, vector<128x128xf32>
    %c0_7 = arith.constant 0 : index
    %c0_8 = arith.constant 0 : index
    %15 = vector.load %arg9[%c0_7, %c0_8] : memref<8x128xf32, #tpu.memory_space<vmem>>, vector<8x128xf32>
    %c0_9 = arith.constant 0 : index
    %c0_10 = arith.constant 0 : index
    %16 = vector.load %arg3[%c0_9, %c0_10] : memref<8x128xf32, #tpu.memory_space<vmem>>, vector<8x128xf32>
    %cst_11 = arith.constant dense<0.000000e+00> : vector<8x128xf32>
    %17 = tpu.matmul %16, %14, %cst_11 {dimension_numbers = #tpu.dot_dimension_numbers<[1], [0], [0], [1], [0, 0, 1, 1], [], []>} : vector<8x128xf32>, vector<128x128xf32>, vector<8x128xf32> -> vector<8x128xf32>
    %18 = arith.addf %15, %17 : vector<8x128xf32>
    %c0_12 = arith.constant 0 : index
    %c0_13 = arith.constant 0 : index
    %19 = vector.load %arg9[%c0_12, %c0_13] : memref<8x128xf32, #tpu.memory_space<vmem>>, vector<8x128xf32>
    tpu.vector_store %arg9[%c0_12, %c0_13], %18 {strides = array<i32>} : memref<8x128xf32, #tpu.memory_space<vmem>>, vector<8x128xf32>,
    %c0_i32_14 = arith.constant 0 : i32
    %20 = arith.cmpi eq, %arg2, %c0_i32_14 : i32
    %21 = arith.extui %20 : i1 to i32
    %c0_i32_15 = arith.constant 0 : i32
    %22 = arith.cmpi ne, %21, %c0_i32_15 : i32
    scf.if %22 {
      %c0_16 = arith.constant 0 : index
      %c0_17 = arith.constant 0 : index
      %23 = vector.load %arg9[%c0_16, %c0_17] : memref<8x128xf32, #tpu.memory_space<vmem>>, vector<8x128xf32>
      %c0_18 = arith.constant 0 : index
      %c0_19 = arith.constant 0 : index
      %24 = vector.load %arg7[%c0_18, %c0_19] : memref<1x128xf32, #tpu.memory_space<vmem>>, vector<1x128xf32>
      %25 = vector.broadcast %24 : vector<1x128xf32> to vector<8x128xf32>
      %26 = arith.addf %23, %25 : vector<8x128xf32>
      %c0_20 = arith.constant 0 : index
      %c0_21 = arith.constant 0 : index
      %27 = vector.load %arg8[%c0_20, %c0_21] : memref<8x128xf32, #tpu.memory_space<vmem>>, vector<8x128xf32>
      tpu.vector_store %arg8[%c0_20, %c0_21], %26 {strides = array<i32>} : memref<8x128xf32, #tpu.memory_space<vmem>>, vector<8x128xf32>,
    } else {
    }
    return
  }
  func.func @transform_0(%arg0: i32, %arg1: i32, %arg2: i32) -> (i32, i32) {
    %c0_i32 = arith.constant 0 : i32
    return %arg1, %arg2 : i32, i32
  }
  func.func @transform_1(%arg0: i32, %arg1: i32, %arg2: i32) -> (i32, i32) {
    %c0_i32 = arith.constant 0 : i32
    return %arg2, %arg0 : i32, i32
  }
  func.func @transform_2(%arg0: i32, %arg1: i32, %arg2: i32) -> (i32, i32) {
    %c0_i32 = arith.constant 0 : i32
    return %arg2, %arg0 : i32, i32
  }
  func.func @transform_3(%arg0: i32, %arg1: i32, %arg2: i32) -> (i32, i32) {
    %c0_i32 = arith.constant 0 : i32
    return %arg2, %arg0 : i32, i32
  }
  func.func @transform_4(%arg0: i32, %arg1: i32, %arg2: i32) -> (i32, i32) {
    %c0_i32 = arith.constant 0 : i32
    %c0_i32_0 = arith.constant 0 : i32
    return %c0_i32, %arg0 : i32, i32
  }
  func.func @transform_5(%arg0: i32, %arg1: i32, %arg2: i32) -> (i32, i32) {
    %c0_i32 = arith.constant 0 : i32
    return %arg1, %arg0 : i32, i32
  }
}

</mosaic_0001>

<llo_original>
// kernel: noisy_linear.1
$region0: #{noisy_linear.1}
  #allocation0 [shape = 'u32[]', space=smem, size = 0x4, offset = 0x4, fixed_abs, tag = 'smem constant byte address 0x4 - core index']
  #allocation1 [shape = 'u32[144,128]{1,0:T(1,128)}', space=vmem, size = 0x12000, scoped, tag = 'internal scratch']
  #allocation2 [shape = 'f32[8,128]{1,0:T(8,128)}', space=vmem, size = 0x1000, scoped, tag = 'scratch operand']
  %s0 = inlined_call_operand.vmem [shape: f32[8,128], index: 0, kind: input, shape index: {}]
  %s1 = inlined_call_operand.hbm [shape: f32[32,64], index: 1, kind: input, shape index: {}]
  %s2 = inlined_call_operand.hbm [shape: f32[32,64], index: 2, kind: input, shape index: {}]
  %s3 = inlined_call_operand.vmem [shape: f32[32,64], index: 3, kind: input, shape index: {}]
  %s4 = inlined_call_operand.vmem [shape: f32[1,64], index: 4, kind: input, shape index: {}]
  %s5 = inlined_call_operand.hbm [shape: f32[8,64], index: 5, kind: output, shape index: {}]
  %s6 = sld [smem:[#allocation0]]
  $region46: #{noisy_linear.1} parent=0
    _
  %s8 = ssub.s32 1, %s6
  %s9 = scalar_select 0, %s8, %s6
  $region1: #{noisy_linear.1} parent=0
    #allocation3 [shape = 'u8[65536]{0}', space=vmem, size = 0x10000, scoped, tag = 'input window, operand 1, single buffered']
    #allocation4 [shape = 's32[1]{0}', space=sflag, size = 0x4, scoped, tag = 'scoped memory for noisy_linear.1']
    #allocation5 [shape = 's32[1]{0}', space=sflag, size = 0x4, scoped, tag = 'scoped memory for noisy_linear.1']
    #allocation6 [shape = 'u8[65536]{0}', space=vmem, size = 0x10000, scoped, tag = 'input window, operand 2, single buffered']
    #allocation7 [shape = 's32[1]{0}', space=sflag, size = 0x4, scoped, tag = 'scoped memory for noisy_linear.1']
    #allocation8 [shape = 'u8[4096]{0}', space=vmem, size = 0x1000, scoped, tag = 'output window, operand 0, single buffered']
    %10 = vsyncpa [#allocation4], 0
    %11 = vsyncpa [#allocation7], 0
    %12 = vsyncpa [#allocation5], 0
    // Predicated region
    $region2: #{noisy_linear.1} parent=1 // pred_check
      _
    $region3: #{noisy_linear.1} parent=1 // pred_check_branch
      %14 = sbr.rel (0) target = $region5
    $region4: #{noisy_linear.1} parent=1 // pred_region
      _
    $region5: #{noisy_linear.1} parent=1 // pred_fallthru
      _
    // Predicated region
    $region6: #{noisy_linear.1} parent=1 // pred_check
      _
    $region7: #{noisy_linear.1} parent=1 // pred_check_branch
      %16 = sbr.rel (0) target = $region9
    $region8: #{noisy_linear.1} parent=1 // pred_region
      %s18 = ssub.s32 2048, 512
      %19 = vsyncadd [#allocation4], %s18
      %s20 = sshll.u32 [#allocation3], 4
      %s21 = int_to_ptr.vmem [resolvable:$true] %s20
      %26 = dma.hbm_to_vmem [thread:$0]  %s1, 512, %s21, [#allocation4], 128, 128, 8
    $region9: #{noisy_linear.1} parent=1 // pred_fallthru
      _
    // Predicated region
    $region10: #{noisy_linear.1} parent=1 // pred_check
      _
    $region11: #{noisy_linear.1} parent=1 // pred_check_branch
      %28 = sbr.rel (0) target = $region13
    $region12: #{noisy_linear.1} parent=1 // pred_region
      %s30 = ssub.s32 2048, 512
      %31 = vsyncadd [#allocation7], %s30
      %s32 = sshll.u32 [#allocation6], 4
      %s33 = int_to_ptr.vmem [resolvable:$true] %s32
      %38 = dma.hbm_to_vmem [thread:$0]  %s2, 512, %s33, [#allocation7], 128, 128, 8
    $region13: #{noisy_linear.1} parent=1 // pred_fallthru
      _
    // Predicated region
    $region14: #{noisy_linear.1} parent=1 // pred_check
      _
    $region15: #{noisy_linear.1} parent=1 // pred_check_branch
      %40 = sbr.rel (0) target = $region17
    $region16: #{noisy_linear.1} parent=1 // pred_region
      _
    $region17: #{noisy_linear.1} parent=1 // pred_fallthru
      _
    // Predicated region
    $region18: #{noisy_linear.1} parent=1 // pred_check
      _
    $region19: #{noisy_linear.1} parent=1 // pred_check_branch
      %42 = sbr.rel (0) target = $region21
    $region20: #{noisy_linear.1} parent=1 // pred_region
      _
    $region21: #{noisy_linear.1} parent=1 // pred_fallthru
      _
    // Predicated region
    $region22: #{noisy_linear.1} parent=1 // pred_check
      _
    $region23: #{noisy_linear.1} parent=1 // pred_check_branch
      %44 = sbr.rel (0) target = $region25
    $region24: #{noisy_linear.1} parent=1 // pred_region
      %45 = dma.done [#allocation4], 2048
    $region25: #{noisy_linear.1} parent=1 // pred_fallthru
      _
    // Predicated region
    $region26: #{noisy_linear.1} parent=1 // pred_check
      _
    $region27: #{noisy_linear.1} parent=1 // pred_check_branch
      %47 = sbr.rel (0) target = $region29
    $region28: #{noisy_linear.1} parent=1 // pred_region
      %48 = dma.done [#allocation7], 2048
    $region29: #{noisy_linear.1} parent=1 // pred_fallthru
      _
    %p49 = scmp.eq.s32.totalorder 0, 0
    // Predicated region
    $region30: #{noisy_linear.1} parent=1 // pred_check
      %p50 = pneg %p49
    $region31: #{noisy_linear.1} parent=1 // pred_check_branch
      %52 = sbr.rel (%p50) target = $region33
    $region32: #{noisy_linear.1} parent=1 // pred_region
      %53 = vst [vmem:[#allocation2] sm:$0xff] 0.0
    $region33: #{noisy_linear.1} parent=1 // pred_fallthru
      _
    %v54 = vld [vmem:[#allocation3] sm:$0xff]
    %v55 = vld [vmem:[#allocation3 + $0x8] sm:$0xff]
    %v56 = vld [vmem:[#allocation3 + $0x10] sm:$0xff]
    %v57 = vld [vmem:[#allocation3 + $0x18] sm:$0xff]
    %v58 = vld [vmem:[#allocation3 + $0x20] sm:$0xff]
    %v59 = vld [vmem:[#allocation3 + $0x28] sm:$0xff]
    %v60 = vld [vmem:[#allocation3 + $0x30] sm:$0xff]
    %v61 = vld [vmem:[#allocation3 + $0x38] sm:$0xff]
    %v62 = vld [vmem:[#allocation3 + $0x40] sm:$0xff]
    %v63 = vld [vmem:[#allocation3 + $0x48] sm:$0xff]
    %v64 = vld [vmem:[#allocation3 + $0x50] sm:$0xff]
    %v65 = vld [vmem:[#allocation3 + $0x58] sm:$0xff]
    %v66 = vld [vmem:[#allocation3 + $0x60] sm:$0xff]
    %v67 = vld [vmem:[#allocation3 + $0x68] sm:$0xff]
    %v68 = vld [vmem:[#allocation3 + $0x70] sm:$0xff]
    %v69 = vld [vmem:[#allocation3 + $0x78] sm:$0xff]
    %v70 = vld [vmem:[#allocation6] sm:$0xff]
    %v71 = vld [vmem:[#allocation6 + $0x8] sm:$0xff]
    %v72 = vld [vmem:[#allocation6 + $0x10] sm:$0xff]
    %v73 = vld [vmem:[#allocation6 + $0x18] sm:$0xff]
    %v74 = vld [vmem:[#allocation6 + $0x20] sm:$0xff]
    %v75 = vld [vmem:[#allocation6 + $0x28] sm:$0xff]
    %v76 = vld [vmem:[#allocation6 + $0x30] sm:$0xff]
    %v77 = vld [vmem:[#allocation6 + $0x38] sm:$0xff]
    %v78 = vld [vmem:[#allocation6 + $0x40] sm:$0xff]
    %v79 = vld [vmem:[#allocation6 + $0x48] sm:$0xff]
    %v80 = vld [vmem:[#allocation6 + $0x50] sm:$0xff]
    %v81 = vld [vmem:[#allocation6 + $0x58] sm:$0xff]
    %v82 = vld [vmem:[#allocation6 + $0x60] sm:$0xff]
    %v83 = vld [vmem:[#allocation6 + $0x68] sm:$0xff]
    %v84 = vld [vmem:[#allocation6 + $0x70] sm:$0xff]
    %v85 = vld [vmem:[#allocation6 + $0x78] sm:$0xff]
    %v86 = vld [vmem:[%s3] sm:$0xff]
    %v87 = vld [vmem:[%s3 + $0x8] sm:$0xff]
    %v88 = vld [vmem:[%s3 + $0x10] sm:$0xff]
    %v89 = vld [vmem:[%s3 + $0x18] sm:$0xff]
    %v90 = vld [vmem:[%s3 + $0x20] sm:$0xff]
    %v91 = vld [vmem:[%s3 + $0x28] sm:$0xff]
    %v92 = vld [vmem:[%s3 + $0x30] sm:$0xff]
    %v93 = vld [vmem:[%s3 + $0x38] sm:$0xff]
    %v94 = vld [vmem:[%s3 + $0x40] sm:$0xff]
    %v95 = vld [vmem:[%s3 + $0x48] sm:$0xff]
    %v96 = vld [vmem:[%s3 + $0x50] sm:$0xff]
    %v97 = vld [vmem:[%s3 + $0x58] sm:$0xff]
    %v98 = vld [vmem:[%s3 + $0x60] sm:$0xff]
    %v99 = vld [vmem:[%s3 + $0x68] sm:$0xff]
    %v100 = vld [vmem:[%s3 + $0x70] sm:$0xff]
    %v101 = vld [vmem:[%s3 + $0x78] sm:$0xff]
    %v102 = vmul.f32 %v70, %v86
    %v103 = vmul.f32 %v71, %v87
    %v104 = vmul.f32 %v72, %v88
    %v105 = vmul.f32 %v73, %v89
    %v106 = vmul.f32 %v74, %v90
    %v107 = vmul.f32 %v75, %v91
    %v108 = vmul.f32 %v76, %v92
    %v109 = vmul.f32 %v77, %v93
    %v110 = vmul.f32 %v78, %v94
    %v111 = vmul.f32 %v79, %v95
    %v112 = vmul.f32 %v80, %v96
    %v113 = vmul.f32 %v81, %v97
    %v114 = vmul.f32 %v82, %v98
    %v115 = vmul.f32 %v83, %v99
    %v116 = vmul.f32 %v84, %v100
    %v117 = vmul.f32 %v85, %v101
    %v118 = vadd.f32 %v54, %v102
    %v119 = vadd.f32 %v55, %v103
    %v120 = vadd.f32 %v56, %v104
    %v121 = vadd.f32 %v57, %v105
    %v122 = vadd.f32 %v58, %v106
    %v123 = vadd.f32 %v59, %v107
    %v124 = vadd.f32 %v60, %v108
    %v125 = vadd.f32 %v61, %v109
    %v126 = vadd.f32 %v62, %v110
    %v127 = vadd.f32 %v63, %v111
    %v128 = vadd.f32 %v64, %v112
    %v129 = vadd.f32 %v65, %v113
    %v130 = vadd.f32 %v66, %v114
    %v131 = vadd.f32 %v67, %v115
    %v132 = vadd.f32 %v68, %v116
    %v133 = vadd.f32 %v69, %v117
    %v134 = vlaneseq
    %v135 = vshrl.u32 %v134, 7
    %v136 = vadd.s32 %v135, 8
    %v137 = vadd.s32 %v135, 16
    %v138 = vadd.s32 %v135, 24
    %v139 = vadd.s32 %v135, 32
    %v140 = vadd.s32 %v135, 40
    %v141 = vadd.s32 %v135, 48
    %v142 = vadd.s32 %v135, 56
    %v143 = vadd.s32 %v135, 64
    %v144 = vadd.s32 %v135, 72
    %v145 = vadd.s32 %v135, 80
    %v146 = vadd.s32 %v135, 88
    %v147 = vadd.s32 %v135, 96
    %v148 = vadd.s32 %v135, 104
    %v149 = vadd.s32 %v135, 112
    %v150 = vadd.s32 %v135, 120
    %s151 = scalar_select %p49, 32, 128
    %v152 = vstv %s151
    %vm153 = vcmp.lt.s32.totalorder %v135, %v152
    %vm154 = vcmp.lt.s32.totalorder %v136, %v152
    %vm155 = vcmp.lt.s32.totalorder %v137, %v152
    %vm156 = vcmp.lt.s32.totalorder %v138, %v152
    %vm157 = vcmp.lt.s32.totalorder %v139, %v152
    %vm158 = vcmp.lt.s32.totalorder %v140, %v152
    %vm159 = vcmp.lt.s32.totalorder %v141, %v152
    %vm160 = vcmp.lt.s32.totalorder %v142, %v152
    %vm161 = vcmp.lt.s32.totalorder %v143, %v152
    %vm162 = vcmp.lt.s32.totalorder %v144, %v152
    %vm163 = vcmp.lt.s32.totalorder %v145, %v152
    %vm164 = vcmp.lt.s32.totalorder %v146, %v152
    %vm165 = vcmp.lt.s32.totalorder %v147, %v152
    %vm166 = vcmp.lt.s32.totalorder %v148, %v152
    %vm167 = vcmp.lt.s32.totalorder %v149, %v152
    %vm168 = vcmp.lt.s32.totalorder %v150, %v152
    %v169 = vsel %vm153, %v118, 0.0
    %v170 = vsel %vm154, %v119, 0.0
    %v171 = vsel %vm155, %v120, 0.0
    %v172 = vsel %vm156, %v121, 0.0
    %v173 = vsel %vm157, %v122, 0.0
    %v174 = vsel %vm158, %v123, 0.0
    %v175 = vsel %vm159, %v124, 0.0
    %v176 = vsel %vm160, %v125, 0.0
    %v177 = vsel %vm161, %v126, 0.0
    %v178 = vsel %vm162, %v127, 0.0
    %v179 = vsel %vm163, %v128, 0.0
    %v180 = vsel %vm164, %v129, 0.0
    %v181 = vsel %vm165, %v130, 0.0
    %v182 = vsel %vm166, %v131, 0.0
    %v183 = vsel %vm167, %v132, 0.0
    %v184 = vsel %vm168, %v133, 0.0
    %v185 = vld [vmem:[#allocation2] sm:$0xff]
    %v186 = vld [vmem:[%s0] sm:$0xff]
    %187 = vmatprep.subr.mxu0 0.0
    %188 = vmatpush1.msra.mxu0 %v169
    %189 = vmatprep.subr.mxu0 0.0
    %190 = vmatpush1.msra.mxu0 %v170
    %191 = vmatprep.subr.mxu0 0.0
    %192 = vmatpush1.msra.mxu0 %v171
    %193 = vmatprep.subr.mxu0 0.0
    %194 = vmatpush1.msra.mxu0 %v172
    %195 = vmatprep.subr.mxu0 0.0
    %196 = vmatpush1.msra.mxu0 %v173
    %197 = vmatprep.subr.mxu0 0.0
    %198 = vmatpush1.msra.mxu0 %v174
    %199 = vmatprep.subr.mxu0 0.0
    %200 = vmatpush1.msra.mxu0 %v175
    %201 = vmatprep.subr.mxu0 0.0
    %202 = vmatpush1.msra.mxu0 %v176
    %203 = vmatprep.subr.mxu0 0.0
    %204 = vmatpush1.msra.mxu0 %v177
    %205 = vmatprep.subr.mxu0 0.0
    %206 = vmatpush1.msra.mxu0 %v178
    %207 = vmatprep.subr.mxu0 0.0
    %208 = vmatpush1.msra.mxu0 %v179
    %209 = vmatprep.subr.mxu0 0.0
    %210 = vmatpush1.msra.mxu0 %v180
    %211 = vmatprep.subr.mxu0 0.0
    %212 = vmatpush1.msra.mxu0 %v181
    %213 = vmatprep.subr.mxu0 0.0
    %214 = vmatpush1.msra.mxu0 %v182
    %215 = vmatprep.subr.mxu0 0.0
    %216 = vmatpush1.msra.mxu0 %v183
    %217 = vmatprep.subr.mxu0 0.0
    %218 = vmatpush1.msra.mxu0 %v184
    %219 = vmatprep.subr.mxu0 0.0
    %220 = vmatpush1.msra.mxu0 0.0
    %221 = vmatprep.subr.mxu0 0.0
    %222 = vmatpush1.msra.mxu0 0.0
    %223 = vmatprep.subr.mxu0 0.0
    %224 = vmatpush1.msra.mxu0 0.0
    %225 = vmatprep.subr.mxu0 0.0
    %226 = vmatpush1.msra.mxu0 0.0
    %227 = vmatprep.subr.mxu0 0.0
    %228 = vmatpush1.msra.mxu0 0.0
    %229 = vmatprep.subr.mxu0 0.0
    %230 = vmatpush1.msra.mxu0 0.0
    %231 = vmatprep.subr.mxu0 0.0
    %232 = vmatpush1.msra.mxu0 0.0
    %233 = vmatprep.subr.mxu0 0.0
    %234 = vmatpush1.msra.mxu0 0.0
    %235 = vmatprep.subr.mxu0 0.0
    %236 = vmatpush1.msra.mxu0 0.0
    %237 = vmatprep.subr.mxu0 0.0
    %238 = vmatpush1.msra.mxu0 0.0
    %239 = vmatprep.subr.mxu0 0.0
    %240 = vmatpush1.msra.mxu0 0.0
    %241 = vmatprep.subr.mxu0 0.0
    %242 = vmatpush1.msra.mxu0 0.0
    %243 = vmatprep.subr.mxu0 0.0
    %244 = vmatpush1.msra.mxu0 0.0
    %245 = vmatprep.subr.mxu0 0.0
    %246 = vmatpush1.msra.mxu0 0.0
    %247 = vmatprep.subr.mxu0 0.0
    %248 = vmatpush1.msra.mxu0 0.0
    %249 = vmatprep.subr.mxu0 0.0
    %250 = vmatpush1.msra.mxu0 0.0
    %251 = vmatprep.mubr.f32.mxu0 0.0
    %252 = vmatmul.mubr.f32.gmra.mrb[0].mxu0 %v186
    %v253 = vpop.f32.mrb[0].mxu0
    %v254 = vadd.f32 0.0, %v253
    %v255 = vpop.f32.mrb[0].mxu0
    %256 = vdwg.mxu0
    %v257 = vadd.f32 %v185, %v254
    %258 = vst [vmem:[#allocation2] sm:$0xff] %v257
    // Predicated region
    $region34: #{noisy_linear.1} parent=1 // pred_check
      %p259 = pneg %p49
    $region35: #{noisy_linear.1} parent=1 // pred_check_branch
      %261 = sbr.rel (%p259) target = $region37
    $region36: #{noisy_linear.1} parent=1 // pred_region
      %v262 = vld [vmem:[#allocation2] sm:$0xff]
      %v263 = vld [vmem:[%s4] sm:$0x1]
      %v265 = vlaneseq
      %v266 = vshrl.u32 %v265, 7
      %v267 = vsub.s32 0, %v266
      %v268 = vrot.slane %v263, %v267
      %v270 = vadd.f32 %v262, %v268
      %271 = vst [vmem:[#allocation8] sm:$0xff] %v270
    $region37: #{noisy_linear.1} parent=1 // pred_fallthru
      _
    // Predicated region
    $region38: #{noisy_linear.1} parent=1 // pred_check
      _
    $region39: #{noisy_linear.1} parent=1 // pred_check_branch
      %273 = sbr.rel (0) target = $region41
    $region40: #{noisy_linear.1} parent=1 // pred_region
      %s275 = ssub.s32 128, 128
      %276 = vsyncadd [#allocation5], %s275
      %s278 = sshll.u32 [#allocation8], 4
      %s279 = int_to_ptr.vmem [resolvable:$true] %s278
      %281 = dma.vmem_to_hbm [thread:$0]  %s279, 128, %s5, [#allocation5]
    $region41: #{noisy_linear.1} parent=1 // pred_fallthru
      _
    // Predicated region
    $region42: #{noisy_linear.1} parent=1 // pred_check
      _
    $region43: #{noisy_linear.1} parent=1 // pred_check_branch
      %283 = sbr.rel (0) target = $region45
    $region44: #{noisy_linear.1} parent=1 // pred_region
      %284 = dma.done [#allocation5], 128
    $region45: #{noisy_linear.1} parent=1 // pred_fallthru
      _
    %285 = vsyncpa [#allocation4], 1
    %286 = vsyncpa [#allocation7], 1
    %287 = vsyncpa [#allocation5], 1

</llo_original>
